<compile_context>
chip_gen: v7x
topology: tpu7x:2x2x1
jax: 0.10.0
libtpu: 0.0.40
codegen_flags: <defaults>
</compile_context>

<pallas_src>
import functools

import jax
import jax.numpy as jnp
from jax.experimental import pallas as pl
from jax.experimental.pallas import tpu as pltpu


def conv3x3_kernel(x_ref, w_ref, b_ref, o_ref, cols_ref, *, H, W):
    """3x3 conv (padding=1), channel-major, one K=9*Cin MXU matmul per step.

    x_ref:    (Nb, Cin, H*W)    input images, flat spatial (lane dim)
    w_ref:    (Cout, 9*Cin)     weights, K ordered (dy, dx, cin)
    b_ref:    (Cout, 1)         bias
    o_ref:    (Nb, Cout, H*W)   conv output, channel-major, lane-dense
    cols_ref: (9*Cin, Nb*H*W)   scratch: im2col slab
    """
    Nb, Cin, HW = x_ref.shape

    # Edge masks, built once from a lane iota (p = h*W + w):
    #   row >= 1      <=>  p >= W
    #   row <= H - 2  <=>  p <  (H-1)*W
    #   col(p) = p & (W-1) for power-of-two W (avoids vector integer div/rem).
    pos = jax.lax.broadcasted_iota(jnp.int32, (Cin, HW), 1)
    if W & (W - 1) == 0:
        colw = pos & (W - 1)
    else:
        colw = pos % W  # TODO(synk): non-pow2 W relies on Mosaic vector rem
    not_top = pos >= W             # valid lanes for dy == 0 taps
    not_bot = pos < (H - 1) * W    # valid lanes for dy == 2 taps
    not_lft = colw >= 1            # valid lanes for dx == 0 taps
    not_rgt = colw <= W - 2        # valid lanes for dx == 2 taps

    for n in range(Nb):
        x_img = x_ref[n]                                   # (Cin, H*W)
        for dy in range(3):
            for dx in range(3):
                t = dy * 3 + dx
                # tap value at p is x_img[p + (dy-1)*W + (dx-1)] when in-bounds;
                # with jnp.roll convention result[p] = x[p - shift], so
                # shift = -( (dy-1)*W + (dx-1) ).  Wrapped lanes are masked.
                shift = ((1 - dy) * W + (1 - dx)) % HW
                tap = x_img if shift == 0 else pltpu.roll(x_img, shift, axis=1)
                if dy == 0:
                    tap = jnp.where(not_top, tap, 0.0)
                elif dy == 2:
                    tap = jnp.where(not_bot, tap, 0.0)
                if dx == 0:
                    tap = jnp.where(not_lft, tap, 0.0)
                elif dx == 2:
                    tap = jnp.where(not_rgt, tap, 0.0)
                cols_ref[t * Cin:(t + 1) * Cin, n * HW:(n + 1) * HW] = tap

    # Single MXU contraction (K = 9*Cin); result lanes = spatial (lane-dense,
    # multiple of 256), rows = output channels. One fused bias broadcast-add.
    acc = jnp.dot(w_ref[...], cols_ref[...], preferred_element_type=jnp.float32)
    acc = acc + b_ref[...]
    for n in range(Nb):
        o_ref[n] = acc[:, n * HW:(n + 1) * HW].astype(o_ref.dtype)


def conv3x3_pallas(x_nchw, w2, b2, *, num_batch_blocks=1):
    """x: (N, Cin, H, W) f32, w2: (Cout, 9*Cin), b2: (Cout, 1) -> (N, Cout, H, W).

    num_batch_blocks=1 (default) folds the whole batch into one grid step --
    best on single-TensorCore v5e/v6e.  On v7x set num_batch_blocks=2 so the
    'parallel' grid axis spreads the batch over both TensorCores.
    """
    N, Cin, H, W = x_nchw.shape
    Cout = w2.shape[0]
    HW = H * W
    assert N % num_batch_blocks == 0
    Nb = N // num_batch_blocks

    x_flat = x_nchw.reshape(N, Cin, HW)          # contiguous collapse: free

    out = pl.pallas_call(
        functools.partial(conv3x3_kernel, H=H, W=W),
        out_shape=jax.ShapeDtypeStruct((N, Cout, HW), jnp.float32),
        grid=(num_batch_blocks,),
        in_specs=[
            pl.BlockSpec((Nb, Cin, HW), lambda n: (n, 0, 0)),
            pl.BlockSpec((Cout, 9 * Cin), lambda n: (0, 0)),   # constant block
            pl.BlockSpec((Cout, 1), lambda n: (0, 0)),         # constant block
        ],
        out_specs=pl.BlockSpec((Nb, Cout, HW), lambda n: (n, 0, 0)),
        scratch_shapes=[
            pltpu.VMEM((9 * Cin, Nb * HW), jnp.float32),       # im2col slab
        ],
        compiler_params=pltpu.CompilerParams(
            dimension_semantics=("parallel",)),
    )(x_flat, w2, b2)

    return out.reshape(N, Cout, H, W)


def pixel_shuffle_nchw(y, r):
    """PyTorch nn.PixelShuffle(r) semantics on NCHW."""
    N, C, H, W = y.shape
    Co = C // (r * r)
    y = y.reshape(N, Co, r, r, H, W)
    y = jnp.transpose(y, (0, 1, 4, 2, 5, 3))
    return y.reshape(N, Co, H * r, W * r)


def upsampler_forward(x_nchw, w_oihw, b, r=2, *, num_batch_blocks=1):
    """Matches upsampler.forward: Conv2d(nFeat -> scale*nFeat, 3, pad=1) + PixelShuffle(2)."""
    Cout, Cin = w_oihw.shape[0], w_oihw.shape[1]
    # (Cout, Cin, 3, 3) -> (Cout, 9*Cin) with K ordered (dy, dx, cin), matching
    # the im2col row order built in the kernel.
    w2 = jnp.transpose(w_oihw, (0, 2, 3, 1)).reshape(Cout, 9 * Cin)
    b2 = b.reshape(Cout, 1)
    y = conv3x3_pallas(x_nchw, w2, b2, num_batch_blocks=num_batch_blocks)
    return pixel_shuffle_nchw(y, r)


if __name__ == "__main__":
    # Small shapes consistent with the module: scale=4, nFeat=8, 16x16 input.
    scale, nFeat = 4, 8
    N, H, W = 2, 16, 16
    Cout = scale * nFeat            # 32, divisible by 4 for PixelShuffle(2)

    key = jax.random.PRNGKey(0)
    kx, kw, kb = jax.random.split(key, 3)
    x = jax.random.normal(kx, (N, nFeat, H, W), dtype=jnp.float32)
    # Deterministic synthetic parameters in PyTorch Conv2d (OIHW) layout.
    w = (jax.random.normal(kw, (Cout, nFeat, 3, 3), dtype=jnp.float32)
         * (1.0 / (3 * 3 * nFeat) ** 0.5))
    b = jax.random.normal(kb, (Cout,), dtype=jnp.float32) * 0.01

    fwd = jax.jit(functools.partial(upsampler_forward, r=2))
    out = jax.block_until_ready(fwd(x, w, b))
    assert out.shape == (N, Cout // 4, 2 * H, 2 * W), out.shape

    # Reference check with plain-JAX conv (same semantics as PyTorch Conv2d).
    ref_conv = jax.lax.conv_general_dilated(
        x, w, window_strides=(1, 1), padding=((1, 1), (1, 1)),
        dimension_numbers=("NCHW", "OIHW", "NCHW"))
    ref = pixel_shuffle_nchw(ref_conv + b[None, :, None, None], 2)
    err = float(jnp.max(jnp.abs(out - ref)))
    assert jnp.allclose(out, ref, atol=1e-3, rtol=1e-3), err

    print("KERNEL_OK")
</pallas_src>

<mosaic_0001>
module attributes {stable_mosaic.version = 11 : i64} {
  func.func @conv3x3_kernel(%arg0: i32, %arg1: memref<2x8x256xf32, #tpu.memory_space<vmem>>, %arg2: memref<32x72xf32, #tpu.memory_space<vmem>>, %arg3: memref<32x1xf32, #tpu.memory_space<vmem>>, %arg4: memref<2x32x256xf32, #tpu.memory_space<vmem>>, %arg5: memref<72x512xf32, #tpu.memory_space<vmem>>) attributes {dimension_semantics = [#tpu.dimension_semantics<parallel>], iteration_bounds = array<i64: 1>, scalar_prefetch = 0 : i64, scratch_operands = 1 : i64, tpu.core_type = #tpu.core_type<tc>, window_params = [{transform_indices = @transform_0, window_bounds = array<i64: 2, 8, 256>}, {pipeline_mode = #tpu.pipeline_mode<synchronous>, transform_indices = @transform_1, window_bounds = array<i64: 32, 72>}, {pipeline_mode = #tpu.pipeline_mode<synchronous>, transform_indices = @transform_2, window_bounds = array<i64: 32, 1>}, {transform_indices = @transform_3, window_bounds = array<i64: 2, 32, 256>}]} {
    %0 = tpu.iota {dimensions = array<i32: 1>} : vector<8x256xi32>
    %c15_i32 = arith.constant 15 : i32
    %1 = vector.broadcast %c15_i32 : i32 to vector<8x256xi32>
    %2 = arith.andi %0, %1 : vector<8x256xi32>
    %c16_i32 = arith.constant 16 : i32
    %3 = vector.broadcast %c16_i32 : i32 to vector<8x256xi32>
    %4 = arith.cmpi sge, %0, %3 : vector<8x256xi32>
    %c240_i32 = arith.constant 240 : i32
    %5 = vector.broadcast %c240_i32 : i32 to vector<8x256xi32>
    %6 = arith.cmpi slt, %0, %5 : vector<8x256xi32>
    %c1_i32 = arith.constant 1 : i32
    %7 = vector.broadcast %c1_i32 : i32 to vector<8x256xi32>
    %8 = arith.cmpi sge, %2, %7 : vector<8x256xi32>
    %c14_i32 = arith.constant 14 : i32
    %9 = vector.broadcast %c14_i32 : i32 to vector<8x256xi32>
    %10 = arith.cmpi sle, %2, %9 : vector<8x256xi32>
    %c0 = arith.constant 0 : index
    %c0_0 = arith.constant 0 : index
    %c0_1 = arith.constant 0 : index
    %11 = vector.load %arg1[%c0, %c0_0, %c0_1] : memref<2x8x256xf32, #tpu.memory_space<vmem>>, vector<1x8x256xf32>
    %12 = vector.shape_cast %11 : vector<1x8x256xf32> to vector<8x256xf32>
    %c17_i32 = arith.constant 17 : i32
    %13 = tpu.dynamic_rotate %12 by %c17_i32 dim 1 : vector<8x256xf32>, i32 -> vector<8x256xf32>
    %cst = arith.constant 0.000000e+00 : f32
    %14 = vector.broadcast %cst : f32 to vector<8x256xf32>
    %15 = arith.select %4, %13, %14 : vector<8x256xi1>, vector<8x256xf32>
    %cst_2 = arith.constant 0.000000e+00 : f32
    %16 = vector.broadcast %cst_2 : f32 to vector<8x256xf32>
    %17 = arith.select %8, %15, %16 : vector<8x256xi1>, vector<8x256xf32>
    %c0_3 = arith.constant 0 : index
    %c0_4 = arith.constant 0 : index
    %18 = vector.load %arg5[%c0_3, %c0_4] : memref<72x512xf32, #tpu.memory_space<vmem>>, vector<8x256xf32>
    tpu.vector_store %arg5[%c0_3, %c0_4], %17 {strides = array<i32>} : memref<72x512xf32, #tpu.memory_space<vmem>>, vector<8x256xf32>,
    %c16_i32_5 = arith.constant 16 : i32
    %19 = tpu.dynamic_rotate %12 by %c16_i32_5 dim 1 : vector<8x256xf32>, i32 -> vector<8x256xf32>
    %cst_6 = arith.constant 0.000000e+00 : f32
    %20 = vector.broadcast %cst_6 : f32 to vector<8x256xf32>
    %21 = arith.select %4, %19, %20 : vector<8x256xi1>, vector<8x256xf32>
    %c8 = arith.constant 8 : index
    %c0_7 = arith.constant 0 : index
    %22 = vector.load %arg5[%c8, %c0_7] : memref<72x512xf32, #tpu.memory_space<vmem>>, vector<8x256xf32>
    tpu.vector_store %arg5[%c8, %c0_7], %21 {strides = array<i32>} : memref<72x512xf32, #tpu.memory_space<vmem>>, vector<8x256xf32>,
    %c15_i32_8 = arith.constant 15 : i32
    %23 = tpu.dynamic_rotate %12 by %c15_i32_8 dim 1 : vector<8x256xf32>, i32 -> vector<8x256xf32>
    %cst_9 = arith.constant 0.000000e+00 : f32
    %24 = vector.broadcast %cst_9 : f32 to vector<8x256xf32>
    %25 = arith.select %4, %23, %24 : vector<8x256xi1>, vector<8x256xf32>
    %cst_10 = arith.constant 0.000000e+00 : f32
    %26 = vector.broadcast %cst_10 : f32 to vector<8x256xf32>
    %27 = arith.select %10, %25, %26 : vector<8x256xi1>, vector<8x256xf32>
    %c16 = arith.constant 16 : index
    %c0_11 = arith.constant 0 : index
    %28 = vector.load %arg5[%c16, %c0_11] : memref<72x512xf32, #tpu.memory_space<vmem>>, vector<8x256xf32>
    tpu.vector_store %arg5[%c16, %c0_11], %27 {strides = array<i32>} : memref<72x512xf32, #tpu.memory_space<vmem>>, vector<8x256xf32>,
    %c1_i32_12 = arith.constant 1 : i32
    %29 = tpu.dynamic_rotate %12 by %c1_i32_12 dim 1 : vector<8x256xf32>, i32 -> vector<8x256xf32>
    %cst_13 = arith.constant 0.000000e+00 : f32
    %30 = vector.broadcast %cst_13 : f32 to vector<8x256xf32>
    %31 = arith.select %8, %29, %30 : vector<8x256xi1>, vector<8x256xf32>
    %c24 = arith.constant 24 : index
    %c0_14 = arith.constant 0 : index
    %32 = vector.load %arg5[%c24, %c0_14] : memref<72x512xf32, #tpu.memory_space<vmem>>, vector<8x256xf32>
    tpu.vector_store %arg5[%c24, %c0_14], %31 {strides = array<i32>} : memref<72x512xf32, #tpu.memory_space<vmem>>, vector<8x256xf32>,
    %c32 = arith.constant 32 : index
    %c0_15 = arith.constant 0 : index
    %33 = vector.load %arg5[%c32, %c0_15] : memref<72x512xf32, #tpu.memory_space<vmem>>, vector<8x256xf32>
    tpu.vector_store %arg5[%c32, %c0_15], %12 {strides = array<i32>} : memref<72x512xf32, #tpu.memory_space<vmem>>, vector<8x256xf32>,
    %c255_i32 = arith.constant 255 : i32
    %34 = tpu.dynamic_rotate %12 by %c255_i32 dim 1 : vector<8x256xf32>, i32 -> vector<8x256xf32>
    %cst_16 = arith.constant 0.000000e+00 : f32
    %35 = vector.broadcast %cst_16 : f32 to vector<8x256xf32>
    %36 = arith.select %10, %34, %35 : vector<8x256xi1>, vector<8x256xf32>
    %c40 = arith.constant 40 : index
    %c0_17 = arith.constant 0 : index
    %37 = vector.load %arg5[%c40, %c0_17] : memref<72x512xf32, #tpu.memory_space<vmem>>, vector<8x256xf32>
    tpu.vector_store %arg5[%c40, %c0_17], %36 {strides = array<i32>} : memref<72x512xf32, #tpu.memory_space<vmem>>, vector<8x256xf32>,
    %c241_i32 = arith.constant 241 : i32
    %38 = tpu.dynamic_rotate %12 by %c241_i32 dim 1 : vector<8x256xf32>, i32 -> vector<8x256xf32>
    %cst_18 = arith.constant 0.000000e+00 : f32
    %39 = vector.broadcast %cst_18 : f32 to vector<8x256xf32>
    %40 = arith.select %6, %38, %39 : vector<8x256xi1>, vector<8x256xf32>
    %cst_19 = arith.constant 0.000000e+00 : f32
    %41 = vector.broadcast %cst_19 : f32 to vector<8x256xf32>
    %42 = arith.select %8, %40, %41 : vector<8x256xi1>, vector<8x256xf32>
    %c48 = arith.constant 48 : index
    %c0_20 = arith.constant 0 : index
    %43 = vector.load %arg5[%c48, %c0_20] : memref<72x512xf32, #tpu.memory_space<vmem>>, vector<8x256xf32>
    tpu.vector_store %arg5[%c48, %c0_20], %42 {strides = array<i32>} : memref<72x512xf32, #tpu.memory_space<vmem>>, vector<8x256xf32>,
    %c240_i32_21 = arith.constant 240 : i32
    %44 = tpu.dynamic_rotate %12 by %c240_i32_21 dim 1 : vector<8x256xf32>, i32 -> vector<8x256xf32>
    %cst_22 = arith.constant 0.000000e+00 : f32
    %45 = vector.broadcast %cst_22 : f32 to vector<8x256xf32>
    %46 = arith.select %6, %44, %45 : vector<8x256xi1>, vector<8x256xf32>
    %c56 = arith.constant 56 : index
    %c0_23 = arith.constant 0 : index
    %47 = vector.load %arg5[%c56, %c0_23] : memref<72x512xf32, #tpu.memory_space<vmem>>, vector<8x256xf32>
    tpu.vector_store %arg5[%c56, %c0_23], %46 {strides = array<i32>} : memref<72x512xf32, #tpu.memory_space<vmem>>, vector<8x256xf32>,
    %c239_i32 = arith.constant 239 : i32
    %48 = tpu.dynamic_rotate %12 by %c239_i32 dim 1 : vector<8x256xf32>, i32 -> vector<8x256xf32>
    %cst_24 = arith.constant 0.000000e+00 : f32
    %49 = vector.broadcast %cst_24 : f32 to vector<8x256xf32>
    %50 = arith.select %6, %48, %49 : vector<8x256xi1>, vector<8x256xf32>
    %cst_25 = arith.constant 0.000000e+00 : f32
    %51 = vector.broadcast %cst_25 : f32 to vector<8x256xf32>
    %52 = arith.select %10, %50, %51 : vector<8x256xi1>, vector<8x256xf32>
    %c64 = arith.constant 64 : index
    %c0_26 = arith.constant 0 : index
    %53 = vector.load %arg5[%c64, %c0_26] : memref<72x512xf32, #tpu.memory_space<vmem>>, vector<8x256xf32>
    tpu.vector_store %arg5[%c64, %c0_26], %52 {strides = array<i32>} : memref<72x512xf32, #tpu.memory_space<vmem>>, vector<8x256xf32>,
    %c1 = arith.constant 1 : index
    %c0_27 = arith.constant 0 : index
    %c0_28 = arith.constant 0 : index
    %54 = vector.load %arg1[%c1, %c0_27, %c0_28] : memref<2x8x256xf32, #tpu.memory_space<vmem>>, vector<1x8x256xf32>
    %55 = vector.shape_cast %54 : vector<1x8x256xf32> to vector<8x256xf32>
    %c17_i32_29 = arith.constant 17 : i32
    %56 = tpu.dynamic_rotate %55 by %c17_i32_29 dim 1 : vector<8x256xf32>, i32 -> vector<8x256xf32>
    %cst_30 = arith.constant 0.000000e+00 : f32
    %57 = vector.broadcast %cst_30 : f32 to vector<8x256xf32>
    %58 = arith.select %4, %56, %57 : vector<8x256xi1>, vector<8x256xf32>
    %cst_31 = arith.constant 0.000000e+00 : f32
    %59 = vector.broadcast %cst_31 : f32 to vector<8x256xf32>
    %60 = arith.select %8, %58, %59 : vector<8x256xi1>, vector<8x256xf32>
    %c0_32 = arith.constant 0 : index
    %c256 = arith.constant 256 : index
    %61 = vector.load %arg5[%c0_32, %c256] : memref<72x512xf32, #tpu.memory_space<vmem>>, vector<8x256xf32>
    tpu.vector_store %arg5[%c0_32, %c256], %60 {strides = array<i32>} : memref<72x512xf32, #tpu.memory_space<vmem>>, vector<8x256xf32>,
    %c16_i32_33 = arith.constant 16 : i32
    %62 = tpu.dynamic_rotate %55 by %c16_i32_33 dim 1 : vector<8x256xf32>, i32 -> vector<8x256xf32>
    %cst_34 = arith.constant 0.000000e+00 : f32
    %63 = vector.broadcast %cst_34 : f32 to vector<8x256xf32>
    %64 = arith.select %4, %62, %63 : vector<8x256xi1>, vector<8x256xf32>
    %c8_35 = arith.constant 8 : index
    %c256_36 = arith.constant 256 : index
    %65 = vector.load %arg5[%c8_35, %c256_36] : memref<72x512xf32, #tpu.memory_space<vmem>>, vector<8x256xf32>
    tpu.vector_store %arg5[%c8_35, %c256_36], %64 {strides = array<i32>} : memref<72x512xf32, #tpu.memory_space<vmem>>, vector<8x256xf32>,
    %c15_i32_37 = arith.constant 15 : i32
    %66 = tpu.dynamic_rotate %55 by %c15_i32_37 dim 1 : vector<8x256xf32>, i32 -> vector<8x256xf32>
    %cst_38 = arith.constant 0.000000e+00 : f32
    %67 = vector.broadcast %cst_38 : f32 to vector<8x256xf32>
    %68 = arith.select %4, %66, %67 : vector<8x256xi1>, vector<8x256xf32>
    %cst_39 = arith.constant 0.000000e+00 : f32
    %69 = vector.broadcast %cst_39 : f32 to vector<8x256xf32>
    %70 = arith.select %10, %68, %69 : vector<8x256xi1>, vector<8x256xf32>
    %c16_40 = arith.constant 16 : index
    %c256_41 = arith.constant 256 : index
    %71 = vector.load %arg5[%c16_40, %c256_41] : memref<72x512xf32, #tpu.memory_space<vmem>>, vector<8x256xf32>
    tpu.vector_store %arg5[%c16_40, %c256_41], %70 {strides = array<i32>} : memref<72x512xf32, #tpu.memory_space<vmem>>, vector<8x256xf32>,
    %c1_i32_42 = arith.constant 1 : i32
    %72 = tpu.dynamic_rotate %55 by %c1_i32_42 dim 1 : vector<8x256xf32>, i32 -> vector<8x256xf32>
    %cst_43 = arith.constant 0.000000e+00 : f32
    %73 = vector.broadcast %cst_43 : f32 to vector<8x256xf32>
    %74 = arith.select %8, %72, %73 : vector<8x256xi1>, vector<8x256xf32>
    %c24_44 = arith.constant 24 : index
    %c256_45 = arith.constant 256 : index
    %75 = vector.load %arg5[%c24_44, %c256_45] : memref<72x512xf32, #tpu.memory_space<vmem>>, vector<8x256xf32>
    tpu.vector_store %arg5[%c24_44, %c256_45], %74 {strides = array<i32>} : memref<72x512xf32, #tpu.memory_space<vmem>>, vector<8x256xf32>,
    %c32_46 = arith.constant 32 : index
    %c256_47 = arith.constant 256 : index
    %76 = vector.load %arg5[%c32_46, %c256_47] : memref<72x512xf32, #tpu.memory_space<vmem>>, vector<8x256xf32>
    tpu.vector_store %arg5[%c32_46, %c256_47], %55 {strides = array<i32>} : memref<72x512xf32, #tpu.memory_space<vmem>>, vector<8x256xf32>,
    %c255_i32_48 = arith.constant 255 : i32
    %77 = tpu.dynamic_rotate %55 by %c255_i32_48 dim 1 : vector<8x256xf32>, i32 -> vector<8x256xf32>
    %cst_49 = arith.constant 0.000000e+00 : f32
    %78 = vector.broadcast %cst_49 : f32 to vector<8x256xf32>
    %79 = arith.select %10, %77, %78 : vector<8x256xi1>, vector<8x256xf32>
    %c40_50 = arith.constant 40 : index
    %c256_51 = arith.constant 256 : index
    %80 = vector.load %arg5[%c40_50, %c256_51] : memref<72x512xf32, #tpu.memory_space<vmem>>, vector<8x256xf32>
    tpu.vector_store %arg5[%c40_50, %c256_51], %79 {strides = array<i32>} : memref<72x512xf32, #tpu.memory_space<vmem>>, vector<8x256xf32>,
    %c241_i32_52 = arith.constant 241 : i32
    %81 = tpu.dynamic_rotate %55 by %c241_i32_52 dim 1 : vector<8x256xf32>, i32 -> vector<8x256xf32>
    %cst_53 = arith.constant 0.000000e+00 : f32
    %82 = vector.broadcast %cst_53 : f32 to vector<8x256xf32>
    %83 = arith.select %6, %81, %82 : vector<8x256xi1>, vector<8x256xf32>
    %cst_54 = arith.constant 0.000000e+00 : f32
    %84 = vector.broadcast %cst_54 : f32 to vector<8x256xf32>
    %85 = arith.select %8, %83, %84 : vector<8x256xi1>, vector<8x256xf32>
    %c48_55 = arith.constant 48 : index
    %c256_56 = arith.constant 256 : index
    %86 = vector.load %arg5[%c48_55, %c256_56] : memref<72x512xf32, #tpu.memory_space<vmem>>, vector<8x256xf32>
    tpu.vector_store %arg5[%c48_55, %c256_56], %85 {strides = array<i32>} : memref<72x512xf32, #tpu.memory_space<vmem>>, vector<8x256xf32>,
    %c240_i32_57 = arith.constant 240 : i32
    %87 = tpu.dynamic_rotate %55 by %c240_i32_57 dim 1 : vector<8x256xf32>, i32 -> vector<8x256xf32>
    %cst_58 = arith.constant 0.000000e+00 : f32
    %88 = vector.broadcast %cst_58 : f32 to vector<8x256xf32>
    %89 = arith.select %6, %87, %88 : vector<8x256xi1>, vector<8x256xf32>
    %c56_59 = arith.constant 56 : index
    %c256_60 = arith.constant 256 : index
    %90 = vector.load %arg5[%c56_59, %c256_60] : memref<72x512xf32, #tpu.memory_space<vmem>>, vector<8x256xf32>
    tpu.vector_store %arg5[%c56_59, %c256_60], %89 {strides = array<i32>} : memref<72x512xf32, #tpu.memory_space<vmem>>, vector<8x256xf32>,
    %c239_i32_61 = arith.constant 239 : i32
    %91 = tpu.dynamic_rotate %55 by %c239_i32_61 dim 1 : vector<8x256xf32>, i32 -> vector<8x256xf32>
    %cst_62 = arith.constant 0.000000e+00 : f32
    %92 = vector.broadcast %cst_62 : f32 to vector<8x256xf32>
    %93 = arith.select %6, %91, %92 : vector<8x256xi1>, vector<8x256xf32>
    %cst_63 = arith.constant 0.000000e+00 : f32
    %94 = vector.broadcast %cst_63 : f32 to vector<8x256xf32>
    %95 = arith.select %10, %93, %94 : vector<8x256xi1>, vector<8x256xf32>
    %c64_64 = arith.constant 64 : index
    %c256_65 = arith.constant 256 : index
    %96 = vector.load %arg5[%c64_64, %c256_65] : memref<72x512xf32, #tpu.memory_space<vmem>>, vector<8x256xf32>
    tpu.vector_store %arg5[%c64_64, %c256_65], %95 {strides = array<i32>} : memref<72x512xf32, #tpu.memory_space<vmem>>, vector<8x256xf32>,
    %c0_66 = arith.constant 0 : index
    %c0_67 = arith.constant 0 : index
    %97 = vector.load %arg2[%c0_66, %c0_67] : memref<32x72xf32, #tpu.memory_space<vmem>>, vector<32x72xf32>
    %c0_68 = arith.constant 0 : index
    %c0_69 = arith.constant 0 : index
    %98 = vector.load %arg5[%c0_68, %c0_69] : memref<72x512xf32, #tpu.memory_space<vmem>>, vector<72x512xf32>
    %cst_70 = arith.constant dense<0.000000e+00> : vector<32x512xf32>
    %99 = tpu.matmul %97, %98, %cst_70 {dimension_numbers = #tpu.dot_dimension_numbers<[1], [0], [0], [1], [0, 0, 1, 1], [], []>} : vector<32x72xf32>, vector<72x512xf32>, vector<32x512xf32> -> vector<32x512xf32>
    %c0_71 = arith.constant 0 : index
    %c0_72 = arith.constant 0 : index
    %100 = vector.load %arg3[%c0_71, %c0_72] : memref<32x1xf32, #tpu.memory_space<vmem>>, vector<32x1xf32>
    %101 = vector.broadcast %100 : vector<32x1xf32> to vector<32x512xf32>
    %102 = arith.addf %99, %101 : vector<32x512xf32>
    %103 = vector.extract_strided_slice %102 {offsets = [0, 0], sizes = [32, 256], strides = [1, 1]} : vector<32x512xf32> to vector<32x256xf32>
    %c0_73 = arith.constant 0 : index
    %c0_74 = arith.constant 0 : index
    %c0_75 = arith.constant 0 : index
    %104 = vector.load %arg4[%c0_73, %c0_74, %c0_75] : memref<2x32x256xf32, #tpu.memory_space<vmem>>, vector<1x32x256xf32>
    %105 = vector.shape_cast %104 : vector<1x32x256xf32> to vector<32x256xf32>
    %106 = vector.shape_cast %103 : vector<32x256xf32> to vector<1x32x256xf32>
    tpu.vector_store %arg4[%c0_73, %c0_74, %c0_75], %106 {strides = array<i32>} : memref<2x32x256xf32, #tpu.memory_space<vmem>>, vector<1x32x256xf32>,
    %107 = vector.extract_strided_slice %102 {offsets = [0, 256], sizes = [32, 256], strides = [1, 1]} : vector<32x512xf32> to vector<32x256xf32>
    %c1_76 = arith.constant 1 : index
    %c0_77 = arith.constant 0 : index
    %c0_78 = arith.constant 0 : index
    %108 = vector.load %arg4[%c1_76, %c0_77, %c0_78] : memref<2x32x256xf32, #tpu.memory_space<vmem>>, vector<1x32x256xf32>
    %109 = vector.shape_cast %108 : vector<1x32x256xf32> to vector<32x256xf32>
    %110 = vector.shape_cast %107 : vector<32x256xf32> to vector<1x32x256xf32>
    tpu.vector_store %arg4[%c1_76, %c0_77, %c0_78], %110 {strides = array<i32>} : memref<2x32x256xf32, #tpu.memory_space<vmem>>, vector<1x32x256xf32>,
    return
  }
  func.func @transform_0(%arg0: i32) -> (i32, i32, i32) {
    %c0_i32 = arith.constant 0 : i32
    %c0_i32_0 = arith.constant 0 : i32
    %c0_i32_1 = arith.constant 0 : i32
    return %arg0, %c0_i32, %c0_i32_0 : i32, i32, i32
  }
  func.func @transform_1(%arg0: i32) -> (i32, i32) {
    %c0_i32 = arith.constant 0 : i32
    %c0_i32_0 = arith.constant 0 : i32
    %c0_i32_1 = arith.constant 0 : i32
    return %c0_i32, %c0_i32_0 : i32, i32
  }
  func.func @transform_2(%arg0: i32) -> (i32, i32) {
    %c0_i32 = arith.constant 0 : i32
    %c0_i32_0 = arith.constant 0 : i32
    %c0_i32_1 = arith.constant 0 : i32
    return %c0_i32, %c0_i32_0 : i32, i32
  }
  func.func @transform_3(%arg0: i32) -> (i32, i32, i32) {
    %c0_i32 = arith.constant 0 : i32
    %c0_i32_0 = arith.constant 0 : i32
    %c0_i32_1 = arith.constant 0 : i32
    return %arg0, %c0_i32, %c0_i32_0 : i32, i32, i32
  }
}

</mosaic_0001>

<llo_original>
// kernel: upsampler_forward.1
$region0: #{upsampler_forward.1}
  #allocation0 [shape = 'u32[]', space=smem, size = 0x4, offset = 0x4, fixed_abs, tag = 'smem constant byte address 0x4 - core index']
  #allocation1 [shape = 'u32[144,128]{1,0:T(1,128)}', space=vmem, size = 0x12000, scoped, tag = 'internal scratch']
  #allocation2 [shape = 'f32[72,512]{1,0:T(8,128)}', space=vmem, size = 0x24000, scoped, tag = 'scratch operand']
  %s0 = inlined_call_operand.vmem [shape: f32[2,8,256], index: 0, kind: input, shape index: {}]
  %s1 = inlined_call_operand.vmem [shape: f32[32,72], index: 1, kind: input, shape index: {}]
  %s2 = inlined_call_operand.vmem [shape: f32[32,1], index: 2, kind: input, shape index: {}]
  %s3 = inlined_call_operand.vmem [shape: f32[2,32,256], index: 3, kind: output, shape index: {}]
  %s4 = sld [smem:[#allocation0]]
  $region22: #{upsampler_forward.1} parent=0
    _
  %s6 = ssub.s32 1, %s4
  %s7 = scalar_select 0, %s6, %s4
  // Predicated region
  $region2: #{upsampler_forward.1} parent=0 // pred_check
    _
  $region3: #{upsampler_forward.1} parent=0 // pred_check_branch
    %9 = sbr.rel (0) target = $region5
  $region4: #{upsampler_forward.1} parent=0 // pred_region
    _
  $region5: #{upsampler_forward.1} parent=0 // pred_fallthru
    _
  // Predicated region
  $region6: #{upsampler_forward.1} parent=0 // pred_check
    _
  $region7: #{upsampler_forward.1} parent=0 // pred_check_branch
    %11 = sbr.rel (0) target = $region9
  $region8: #{upsampler_forward.1} parent=0 // pred_region
    _
  $region9: #{upsampler_forward.1} parent=0 // pred_fallthru
    _
  // Predicated region
  $region10: #{upsampler_forward.1} parent=0 // pred_check
    _
  $region11: #{upsampler_forward.1} parent=0 // pred_check_branch
    %13 = sbr.rel (0) target = $region13
  $region12: #{upsampler_forward.1} parent=0 // pred_region
    _
  $region13: #{upsampler_forward.1} parent=0 // pred_fallthru
    _
  %v14 = vlaneseq
  %v15 = vand.u32 %v14, 127
  %v16 = vadd.s32 %v15, 128
  %v17 = vand.u32 %v15, 15
  %v18 = vand.u32 %v16, 15
  %vm19 = vcmp.ge.s32.totalorder %v15, 16
  %vm20 = vcmp.ge.s32.totalorder %v16, 16
  %vm21 = vcmp.lt.s32.totalorder %v15, 240
  %vm22 = vcmp.lt.s32.totalorder %v16, 240
  %vm23 = vcmp.ge.s32.totalorder %v17, 1
  %vm24 = vcmp.ge.s32.totalorder %v18, 1
  %vm25 = vcmp.le.s32.totalorder %v17, 14
  %vm26 = vcmp.le.s32.totalorder %v18, 14
  %v27 = vld [vmem:[%s0] sm:$0xff]
  %v28 = vld [vmem:[%s0 + $0x8] sm:$0xff]
  %29 = vrot.lane.b32.xlu0 %v27, 17
  %v30 = vpop.permute.xlu0 %29
  %31 = vrot.lane.b32.xlu0 %v28, 17
  %v32 = vpop.permute.xlu0 %31
  %vm33 = vcmp.lt.s32.totalorder %v15, 17
  %v34 = vsel %vm33, %v30, %v32
  %v35 = vsel %vm33, %v32, %v30
  %v36 = vsel %vm19, %v35, 0.0
  %v37 = vsel %vm20, %v34, 0.0
  %v38 = vsel %vm23, %v36, 0.0
  %v39 = vsel %vm24, %v37, 0.0
  %40 = vst [vmem:[#allocation2] sm:$0xff] %v38
  %41 = vst [vmem:[#allocation2 + $0x8] sm:$0xff] %v39
  %42 = vrot.lane.b32.xlu0 %v27, 16
  %v43 = vpop.permute.xlu0 %42
  %44 = vrot.lane.b32.xlu0 %v28, 16
  %v45 = vpop.permute.xlu0 %44
  %vm46 = vcmp.lt.s32.totalorder %v15, 16
  %v47 = vsel %vm46, %v43, %v45
  %v48 = vsel %vm46, %v45, %v43
  %v49 = vsel %vm19, %v48, 0.0
  %v50 = vsel %vm20, %v47, 0.0
  %51 = vst [vmem:[#allocation2 + $0x20] sm:$0xff] %v49
  %52 = vst [vmem:[#allocation2 + $0x28] sm:$0xff] %v50
  %53 = vrot.lane.b32.xlu0 %v27, 15
  %v54 = vpop.permute.xlu0 %53
  %55 = vrot.lane.b32.xlu0 %v28, 15
  %v56 = vpop.permute.xlu0 %55
  %vm57 = vcmp.lt.s32.totalorder %v15, 15
  %v58 = vsel %vm57, %v54, %v56
  %v59 = vsel %vm57, %v56, %v54
  %v60 = vsel %vm19, %v59, 0.0
  %v61 = vsel %vm20, %v58, 0.0
  %v62 = vsel %vm25, %v60, 0.0
  %v63 = vsel %vm26, %v61, 0.0
  %64 = vst [vmem:[#allocation2 + $0x40] sm:$0xff] %v62
  %65 = vst [vmem:[#allocation2 + $0x48] sm:$0xff] %v63
  %66 = vrot.lane.b32.xlu0 %v27, 1
  %v67 = vpop.permute.xlu0 %66
  %68 = vrot.lane.b32.xlu0 %v28, 1
  %v69 = vpop.permute.xlu0 %68
  %vm70 = vcmp.lt.s32.totalorder %v15, 1
  %v71 = vsel %vm70, %v67, %v69
  %v72 = vsel %vm70, %v69, %v67
  %v73 = vsel %vm23, %v72, 0.0
  %v74 = vsel %vm24, %v71, 0.0
  %75 = vst [vmem:[#allocation2 + $0x60] sm:$0xff] %v73
  %76 = vst [vmem:[#allocation2 + $0x68] sm:$0xff] %v74
  %77 = vst [vmem:[#allocation2 + $0x80] sm:$0xff] %v27
  %78 = vst [vmem:[#allocation2 + $0x88] sm:$0xff] %v28
  %79 = vrot.lane.b32.xlu0 %v27, 127
  %v80 = vpop.permute.xlu0 %79
  %81 = vrot.lane.b32.xlu0 %v28, 127
  %v82 = vpop.permute.xlu0 %81
  %vm83 = vcmp.lt.s32.totalorder %v15, 127
  %v84 = vsel %vm83, %v80, %v82
  %v85 = vsel %vm83, %v82, %v80
  %v86 = vsel %vm25, %v84, 0.0
  %v87 = vsel %vm26, %v85, 0.0
  %88 = vst [vmem:[#allocation2 + $0xa0] sm:$0xff] %v86
  %89 = vst [vmem:[#allocation2 + $0xa8] sm:$0xff] %v87
  %90 = vrot.lane.b32.xlu0 %v27, 113
  %v91 = vpop.permute.xlu0 %90
  %92 = vrot.lane.b32.xlu0 %v28, 113
  %v93 = vpop.permute.xlu0 %92
  %vm94 = vcmp.lt.s32.totalorder %v15, 113
  %v95 = vsel %vm94, %v91, %v93
  %v96 = vsel %vm94, %v93, %v91
  %v97 = vsel %vm21, %v95, 0.0
  %v98 = vsel %vm22, %v96, 0.0
  %v99 = vsel %vm23, %v97, 0.0
  %v100 = vsel %vm24, %v98, 0.0
  %101 = vst [vmem:[#allocation2 + $0xc0] sm:$0xff] %v99
  %102 = vst [vmem:[#allocation2 + $0xc8] sm:$0xff] %v100
  %103 = vrot.lane.b32.xlu0 %v27, 112
  %v104 = vpop.permute.xlu0 %103
  %105 = vrot.lane.b32.xlu0 %v28, 112
  %v106 = vpop.permute.xlu0 %105
  %vm107 = vcmp.lt.s32.totalorder %v15, 112
  %v108 = vsel %vm107, %v104, %v106
  %v109 = vsel %vm107, %v106, %v104
  %v110 = vsel %vm21, %v108, 0.0
  %v111 = vsel %vm22, %v109, 0.0
  %112 = vst [vmem:[#allocation2 + $0xe0] sm:$0xff] %v110
  %113 = vst [vmem:[#allocation2 + $0xe8] sm:$0xff] %v111
  %114 = vrot.lane.b32.xlu0 %v27, 111
  %v115 = vpop.permute.xlu0 %114
  %116 = vrot.lane.b32.xlu0 %v28, 111
  %v117 = vpop.permute.xlu0 %116
  %vm118 = vcmp.lt.s32.totalorder %v15, 111
  %v119 = vsel %vm118, %v115, %v117
  %v120 = vsel %vm118, %v117, %v115
  %v121 = vsel %vm21, %v119, 0.0
  %v122 = vsel %vm22, %v120, 0.0
  %v123 = vsel %vm25, %v121, 0.0
  %v124 = vsel %vm26, %v122, 0.0
  %125 = vst [vmem:[#allocation2 + $0x100] sm:$0xff] %v123
  %126 = vst [vmem:[#allocation2 + $0x108] sm:$0xff] %v124
  %s127 = scalar_lea.vmem %s0, 16
  %v128 = vld [vmem:[%s127] sm:$0xff]
  %v129 = vld [vmem:[%s127 + $0x8] sm:$0xff]
  %130 = vrot.lane.b32.xlu0 %v128, 17
  %v131 = vpop.permute.xlu0 %130
  %132 = vrot.lane.b32.xlu0 %v129, 17
  %v133 = vpop.permute.xlu0 %132
  %v134 = vsel %vm33, %v131, %v133
  %v135 = vsel %vm33, %v133, %v131
  %v136 = vsel %vm19, %v135, 0.0
  %v137 = vsel %vm20, %v134, 0.0
  %v138 = vsel %vm23, %v136, 0.0
  %v139 = vsel %vm24, %v137, 0.0
  %140 = vst [vmem:[#allocation2 + $0x10] sm:$0xff] %v138
  %141 = vst [vmem:[#allocation2 + $0x18] sm:$0xff] %v139
  %142 = vrot.lane.b32.xlu0 %v128, 16
  %v143 = vpop.permute.xlu0 %142
  %144 = vrot.lane.b32.xlu0 %v129, 16
  %v145 = vpop.permute.xlu0 %144
  %v146 = vsel %vm46, %v143, %v145
  %v147 = vsel %vm46, %v145, %v143
  %v148 = vsel %vm19, %v147, 0.0
  %v149 = vsel %vm20, %v146, 0.0
  %150 = vst [vmem:[#allocation2 + $0x30] sm:$0xff] %v148
  %151 = vst [vmem:[#allocation2 + $0x38] sm:$0xff] %v149
  %152 = vrot.lane.b32.xlu0 %v128, 15
  %v153 = vpop.permute.xlu0 %152
  %154 = vrot.lane.b32.xlu0 %v129, 15
  %v155 = vpop.permute.xlu0 %154
  %v156 = vsel %vm57, %v153, %v155
  %v157 = vsel %vm57, %v155, %v153
  %v158 = vsel %vm19, %v157, 0.0
  %v159 = vsel %vm20, %v156, 0.0
  %v160 = vsel %vm25, %v158, 0.0
  %v161 = vsel %vm26, %v159, 0.0
  %162 = vst [vmem:[#allocation2 + $0x50] sm:$0xff] %v160
  %163 = vst [vmem:[#allocation2 + $0x58] sm:$0xff] %v161
  %164 = vrot.lane.b32.xlu0 %v128, 1
  %v165 = vpop.permute.xlu0 %164
  %166 = vrot.lane.b32.xlu0 %v129, 1
  %v167 = vpop.permute.xlu0 %166
  %v168 = vsel %vm70, %v165, %v167
  %v169 = vsel %vm70, %v167, %v165
  %v170 = vsel %vm23, %v169, 0.0
  %v171 = vsel %vm24, %v168, 0.0
  %172 = vst [vmem:[#allocation2 + $0x70] sm:$0xff] %v170
  %173 = vst [vmem:[#allocation2 + $0x78] sm:$0xff] %v171
  %174 = vst [vmem:[#allocation2 + $0x90] sm:$0xff] %v128
  %175 = vst [vmem:[#allocation2 + $0x98] sm:$0xff] %v129
  %176 = vrot.lane.b32.xlu0 %v128, 127
  %v177 = vpop.permute.xlu0 %176
  %178 = vrot.lane.b32.xlu0 %v129, 127
  %v179 = vpop.permute.xlu0 %178
  %v180 = vsel %vm83, %v177, %v179
  %v181 = vsel %vm83, %v179, %v177
  %v182 = vsel %vm25, %v180, 0.0
  %v183 = vsel %vm26, %v181, 0.0
  %184 = vst [vmem:[#allocation2 + $0xb0] sm:$0xff] %v182
  %185 = vst [vmem:[#allocation2 + $0xb8] sm:$0xff] %v183
  %186 = vrot.lane.b32.xlu0 %v128, 113
  %v187 = vpop.permute.xlu0 %186
  %188 = vrot.lane.b32.xlu0 %v129, 113
  %v189 = vpop.permute.xlu0 %188
  %v190 = vsel %vm94, %v187, %v189
  %v191 = vsel %vm94, %v189, %v187
  %v192 = vsel %vm21, %v190, 0.0
  %v193 = vsel %vm22, %v191, 0.0
  %v194 = vsel %vm23, %v192, 0.0
  %v195 = vsel %vm24, %v193, 0.0
  %196 = vst [vmem:[#allocation2 + $0xd0] sm:$0xff] %v194
  %197 = vst [vmem:[#allocation2 + $0xd8] sm:$0xff] %v195
  %198 = vrot.lane.b32.xlu0 %v128, 112
  %v199 = vpop.permute.xlu0 %198
  %200 = vrot.lane.b32.xlu0 %v129, 112
  %v201 = vpop.permute.xlu0 %200
  %v202 = vsel %vm107, %v199, %v201
  %v203 = vsel %vm107, %v201, %v199
  %v204 = vsel %vm21, %v202, 0.0
  %v205 = vsel %vm22, %v203, 0.0
  %206 = vst [vmem:[#allocation2 + $0xf0] sm:$0xff] %v204
  %207 = vst [vmem:[#allocation2 + $0xf8] sm:$0xff] %v205
  %208 = vrot.lane.b32.xlu0 %v128, 111
  %v209 = vpop.permute.xlu0 %208
  %210 = vrot.lane.b32.xlu0 %v129, 111
  %v211 = vpop.permute.xlu0 %210
  %v212 = vsel %vm118, %v209, %v211
  %v213 = vsel %vm118, %v211, %v209
  %v214 = vsel %vm21, %v212, 0.0
  %v215 = vsel %vm22, %v213, 0.0
  %v216 = vsel %vm25, %v214, 0.0
  %v217 = vsel %vm26, %v215, 0.0
  %218 = vst [vmem:[#allocation2 + $0x110] sm:$0xff] %v216
  %219 = vst [vmem:[#allocation2 + $0x118] sm:$0xff] %v217
  %v220 = vld [vmem:[%s1] sm:$0xff]
  %v221 = vld [vmem:[%s1 + $0x8] sm:$0xff]
  %v222 = vld [vmem:[%s1 + $0x10] sm:$0xff]
  %v223 = vld [vmem:[%s1 + $0x18] sm:$0xff]
  %v224 = vld [vmem:[#allocation2] sm:$0xff]
  %v225 = vld [vmem:[#allocation2 + $0x8] sm:$0xff]
  %v226 = vld [vmem:[#allocation2 + $0x10] sm:$0xff]
  %v227 = vld [vmem:[#allocation2 + $0x18] sm:$0xff]
  %v228 = vld [vmem:[#allocation2 + $0x20] sm:$0xff]
  %v229 = vld [vmem:[#allocation2 + $0x28] sm:$0xff]
  %v230 = vld [vmem:[#allocation2 + $0x30] sm:$0xff]
  %v231 = vld [vmem:[#allocation2 + $0x38] sm:$0xff]
  %v232 = vld [vmem:[#allocation2 + $0x40] sm:$0xff]
  %v233 = vld [vmem:[#allocation2 + $0x48] sm:$0xff]
  %v234 = vld [vmem:[#allocation2 + $0x50] sm:$0xff]
  %v235 = vld [vmem:[#allocation2 + $0x58] sm:$0xff]
  %v236 = vld [vmem:[#allocation2 + $0x60] sm:$0xff]
  %v237 = vld [vmem:[#allocation2 + $0x68] sm:$0xff]
  %v238 = vld [vmem:[#allocation2 + $0x70] sm:$0xff]
  %v239 = vld [vmem:[#allocation2 + $0x78] sm:$0xff]
  %v240 = vld [vmem:[#allocation2 + $0x80] sm:$0xff]
  %v241 = vld [vmem:[#allocation2 + $0x88] sm:$0xff]
  %v242 = vld [vmem:[#allocation2 + $0x90] sm:$0xff]
  %v243 = vld [vmem:[#allocation2 + $0x98] sm:$0xff]
  %v244 = vld [vmem:[#allocation2 + $0xa0] sm:$0xff]
  %v245 = vld [vmem:[#allocation2 + $0xa8] sm:$0xff]
  %v246 = vld [vmem:[#allocation2 + $0xb0] sm:$0xff]
  %v247 = vld [vmem:[#allocation2 + $0xb8] sm:$0xff]
  %v248 = vld [vmem:[#allocation2 + $0xc0] sm:$0xff]
  %v249 = vld [vmem:[#allocation2 + $0xc8] sm:$0xff]
  %v250 = vld [vmem:[#allocation2 + $0xd0] sm:$0xff]
  %v251 = vld [vmem:[#allocation2 + $0xd8] sm:$0xff]
  %v252 = vld [vmem:[#allocation2 + $0xe0] sm:$0xff]
  %v253 = vld [vmem:[#allocation2 + $0xe8] sm:$0xff]
  %v254 = vld [vmem:[#allocation2 + $0xf0] sm:$0xff]
  %v255 = vld [vmem:[#allocation2 + $0xf8] sm:$0xff]
  %v256 = vld [vmem:[#allocation2 + $0x100] sm:$0xff]
  %v257 = vld [vmem:[#allocation2 + $0x108] sm:$0xff]
  %v258 = vld [vmem:[#allocation2 + $0x110] sm:$0xff]
  %v259 = vld [vmem:[#allocation2 + $0x118] sm:$0xff]
  %v260 = vld [vmem:[%s2] sm:$0xff]
  %v261 = vld [vmem:[%s2 + $0x8] sm:$0xff]
  %v262 = vld [vmem:[%s2 + $0x10] sm:$0xff]
  %v263 = vld [vmem:[%s2 + $0x18] sm:$0xff]
  %265 = vset.pattern.permute.xlu0 0
  %266 = vperm.xlu0 %265, %v260
  %v267 = vpop.permute.xlu0 %266
  %270 = vset.pattern.permute.xlu0 0
  %271 = vperm.xlu0 %270, %v261
  %v272 = vpop.permute.xlu0 %271
  %275 = vset.pattern.permute.xlu0 0
  %276 = vperm.xlu0 %275, %v262
  %v277 = vpop.permute.xlu0 %276
  %280 = vset.pattern.permute.xlu0 0
  %281 = vperm.xlu0 %280, %v263
  %v282 = vpop.permute.xlu0 %281
  %vm284 = vcmask 588800
  %v286 = vsel %vm284, %v220, 0
  %v289 = vsel %vm284, %v221, 0
  %v292 = vsel %vm284, %v222, 0
  %v295 = vsel %vm284, %v223, 0
  %297 = vmatprep.subr.mxu0 %v225
  %298 = vmatpush1.msra.mxu0 %v224
  %299 = vmatprep.subr.mxu0 %v229
  %300 = vmatpush1.msra.mxu0 %v228
  %301 = vmatprep.subr.mxu0 %v233
  %302 = vmatpush1.msra.mxu0 %v232
  %303 = vmatprep.subr.mxu0 %v237
  %304 = vmatpush1.msra.mxu0 %v236
  %305 = vmatprep.subr.mxu0 %v241
  %306 = vmatpush1.msra.mxu0 %v240
  %307 = vmatprep.subr.mxu0 %v245
  %308 = vmatpush1.msra.mxu0 %v244
  %309 = vmatprep.subr.mxu0 %v249
  %310 = vmatpush1.msra.mxu0 %v248
  %311 = vmatprep.subr.mxu0 %v253
  %312 = vmatpush1.msra.mxu0 %v252
  %313 = vmatprep.subr.mxu0 %v257
  %314 = vmatpush1.msra.mxu0 %v256
  %315 = vmatprep.subr.mxu0 0.0
  %316 = vmatpush1.msra.mxu0 0.0
  %317 = vmatprep.subr.mxu0 0.0
  %318 = vmatpush1.msra.mxu0 0.0
  %319 = vmatprep.subr.mxu0 0.0
  %320 = vmatpush1.msra.mxu0 0.0
  %321 = vmatprep.subr.mxu0 0.0
  %322 = vmatpush1.msra.mxu0 0.0
  %323 = vmatprep.subr.mxu0 0.0
  %324 = vmatpush1.msra.mxu0 0.0
  %325 = vmatprep.subr.mxu0 0.0
  %326 = vmatpush1.msra.mxu0 0.0
  %327 = vmatprep.subr.mxu0 0.0
  %328 = vmatpush1.msra.mxu0 0.0
  %329 = vmatprep.subr.mxu0 0.0
  %330 = vmatpush1.msra.mxu0 0.0
  %331 = vmatprep.subr.mxu0 0.0
  %332 = vmatpush1.msra.mxu0 0.0
  %333 = vmatprep.subr.mxu0 0.0
  %334 = vmatpush1.msra.mxu0 0.0
  %335 = vmatprep.subr.mxu0 0.0
  %336 = vmatpush1.msra.mxu0 0.0
  %337 = vmatprep.subr.mxu0 0.0
  %338 = vmatpush1.msra.mxu0 0.0
  %339 = vmatprep.subr.mxu0 0.0
  %340 = vmatpush1.msra.mxu0 0.0
  %341 = vmatprep.subr.mxu0 0.0
  %342 = vmatpush1.msra.mxu0 0.0
  %343 = vmatprep.subr.mxu0 0.0
  %344 = vmatpush1.msra.mxu0 0.0
  %345 = vmatprep.subr.mxu0 0.0
  %346 = vmatpush1.msra.mxu0 0.0
  %347 = vmatprep.subr.mxu0 0.0
  %348 = vmatpush1.msra.mxu0 0.0
  %349 = vmatprep.subr.mxu0 0.0
  %350 = vmatpush1.msra.mxu0 0.0
  %351 = vmatprep.subr.mxu0 0.0
  %352 = vmatpush1.msra.mxu0 0.0
  %353 = vmatprep.subr.mxu0 0.0
  %354 = vmatpush1.msra.mxu0 0.0
  %355 = vmatprep.subr.mxu0 0.0
  %356 = vmatpush1.msra.mxu0 0.0
  %357 = vmatprep.subr.mxu0 0.0
  %358 = vmatpush1.msra.mxu0 0.0
  %359 = vmatprep.subr.mxu0 0.0
  %360 = vmatpush1.msra.mxu0 0.0
  %361 = vmatprep.mubr.f32.mxu0 0.0
  %362 = vmatmul.mubr.f32.gmra.mrb[0].mxu0 %v286
  %v363 = vpop.f32.mrb[0].mxu0
  %v364 = vadd.f32 %v267, %v363
  %v365 = vpop.f32.mrb[0].mxu0
  %v366 = vadd.f32 %v267, %v365
  %367 = vmatprep.mubr.f32.mxu0 0.0
  %368 = vmatmul.mubr.f32.gmra.mrb[0].mxu0 %v289
  %v369 = vpop.f32.mrb[0].mxu0
  %v370 = vadd.f32 %v272, %v369
  %v371 = vpop.f32.mrb[0].mxu0
  %v372 = vadd.f32 %v272, %v371
  %373 = vmatprep.mubr.f32.mxu0 0.0
  %374 = vmatmul.mubr.f32.gmra.mrb[0].mxu0 %v292
  %v375 = vpop.f32.mrb[0].mxu0
  %v376 = vadd.f32 %v277, %v375
  %v377 = vpop.f32.mrb[0].mxu0
  %v378 = vadd.f32 %v277, %v377
  %379 = vmatprep.mubr.f32.mxu0 0.0
  %380 = vmatmul.mubr.f32.gmra.mrb[0].mxu0 %v295
  %v381 = vpop.f32.mrb[0].mxu0
  %v382 = vadd.f32 %v282, %v381
  %v383 = vpop.f32.mrb[0].mxu0
  %v384 = vadd.f32 %v282, %v383
  %385 = vdwg.mxu0
  %386 = vmatprep.subr.mxu0 %v227
  %387 = vmatpush1.msra.mxu0 %v226
  %388 = vmatprep.subr.mxu0 %v231
  %389 = vmatpush1.msra.mxu0 %v230
  %390 = vmatprep.subr.mxu0 %v235
  %391 = vmatpush1.msra.mxu0 %v234
  %392 = vmatprep.subr.mxu0 %v239
  %393 = vmatpush1.msra.mxu0 %v238
  %394 = vmatprep.subr.mxu0 %v243
  %395 = vmatpush1.msra.mxu0 %v242
  %396 = vmatprep.subr.mxu0 %v247
  %397 = vmatpush1.msra.mxu0 %v246
  %398 = vmatprep.subr.mxu0 %v251
  %399 = vmatpush1.msra.mxu0 %v250
  %400 = vmatprep.subr.mxu0 %v255
  %401 = vmatpush1.msra.mxu0 %v254
  %402 = vmatprep.subr.mxu0 %v259
  %403 = vmatpush1.msra.mxu0 %v258
  %404 = vmatprep.subr.mxu0 0.0
  %405 = vmatpush1.msra.mxu0 0.0
  %406 = vmatprep.subr.mxu0 0.0
  %407 = vmatpush1.msra.mxu0 0.0
  %408 = vmatprep.subr.mxu0 0.0
  %409 = vmatpush1.msra.mxu0 0.0
  %410 = vmatprep.subr.mxu0 0.0
  %411 = vmatpush1.msra.mxu0 0.0
  %412 = vmatprep.subr.mxu0 0.0
  %413 = vmatpush1.msra.mxu0 0.0
  %414 = vmatprep.subr.mxu0 0.0
  %415 = vmatpush1.msra.mxu0 0.0
  %416 = vmatprep.subr.mxu0 0.0
  %417 = vmatpush1.msra.mxu0 0.0
  %418 = vmatprep.subr.mxu0 0.0
  %419 = vmatpush1.msra.mxu0 0.0
  %420 = vmatprep.subr.mxu0 0.0
  %421 = vmatpush1.msra.mxu0 0.0
  %422 = vmatprep.subr.mxu0 0.0
  %423 = vmatpush1.msra.mxu0 0.0
  %424 = vmatprep.subr.mxu0 0.0
  %425 = vmatpush1.msra.mxu0 0.0
  %426 = vmatprep.subr.mxu0 0.0
  %427 = vmatpush1.msra.mxu0 0.0
  %428 = vmatprep.subr.mxu0 0.0
  %429 = vmatpush1.msra.mxu0 0.0
  %430 = vmatprep.subr.mxu0 0.0
  %431 = vmatpush1.msra.mxu0 0.0
  %432 = vmatprep.subr.mxu0 0.0
  %433 = vmatpush1.msra.mxu0 0.0
  %434 = vmatprep.subr.mxu0 0.0
  %435 = vmatpush1.msra.mxu0 0.0
  %436 = vmatprep.subr.mxu0 0.0
  %437 = vmatpush1.msra.mxu0 0.0
  %438 = vmatprep.subr.mxu0 0.0
  %439 = vmatpush1.msra.mxu0 0.0
  %440 = vmatprep.subr.mxu0 0.0
  %441 = vmatpush1.msra.mxu0 0.0
  %442 = vmatprep.subr.mxu0 0.0
  %443 = vmatpush1.msra.mxu0 0.0
  %444 = vmatprep.subr.mxu0 0.0
  %445 = vmatpush1.msra.mxu0 0.0
  %446 = vmatprep.subr.mxu0 0.0
  %447 = vmatpush1.msra.mxu0 0.0
  %448 = vmatprep.subr.mxu0 0.0
  %449 = vmatpush1.msra.mxu0 0.0
  %450 = vmatprep.mubr.f32.mxu0 0.0
  %451 = vmatmul.mubr.f32.gmra.mrb[0].mxu0 %v286
  %v452 = vpop.f32.mrb[0].mxu0
  %v453 = vadd.f32 %v267, %v452
  %v454 = vpop.f32.mrb[0].mxu0
  %v455 = vadd.f32 %v267, %v454
  %456 = vmatprep.mubr.f32.mxu0 0.0
  %457 = vmatmul.mubr.f32.gmra.mrb[0].mxu0 %v289
  %v458 = vpop.f32.mrb[0].mxu0
  %v459 = vadd.f32 %v272, %v458
  %v460 = vpop.f32.mrb[0].mxu0
  %v461 = vadd.f32 %v272, %v460
  %462 = vmatprep.mubr.f32.mxu0 0.0
  %463 = vmatmul.mubr.f32.gmra.mrb[0].mxu0 %v292
  %v464 = vpop.f32.mrb[0].mxu0
  %v465 = vadd.f32 %v277, %v464
  %v466 = vpop.f32.mrb[0].mxu0
  %v467 = vadd.f32 %v277, %v466
  %468 = vmatprep.mubr.f32.mxu0 0.0
  %469 = vmatmul.mubr.f32.gmra.mrb[0].mxu0 %v295
  %v470 = vpop.f32.mrb[0].mxu0
  %v471 = vadd.f32 %v282, %v470
  %v472 = vpop.f32.mrb[0].mxu0
  %v473 = vadd.f32 %v282, %v472
  %474 = vdwg.mxu0
  %475 = vst [vmem:[%s3] sm:$0xff] %v364
  %476 = vst [vmem:[%s3 + $0x8] sm:$0xff] %v366
  %477 = vst [vmem:[%s3 + $0x10] sm:$0xff] %v370
  %478 = vst [vmem:[%s3 + $0x18] sm:$0xff] %v372
  %479 = vst [vmem:[%s3 + $0x20] sm:$0xff] %v376
  %480 = vst [vmem:[%s3 + $0x28] sm:$0xff] %v378
  %481 = vst [vmem:[%s3 + $0x30] sm:$0xff] %v382
  %482 = vst [vmem:[%s3 + $0x38] sm:$0xff] %v384
  %s483 = scalar_lea.vmem %s3, 64
  %484 = vst [vmem:[%s483] sm:$0xff] %v453
  %485 = vst [vmem:[%s483 + $0x8] sm:$0xff] %v455
  %486 = vst [vmem:[%s483 + $0x10] sm:$0xff] %v459
  %487 = vst [vmem:[%s483 + $0x18] sm:$0xff] %v461
  %488 = vst [vmem:[%s483 + $0x20] sm:$0xff] %v465
  %489 = vst [vmem:[%s483 + $0x28] sm:$0xff] %v467
  %490 = vst [vmem:[%s483 + $0x30] sm:$0xff] %v471
  %491 = vst [vmem:[%s483 + $0x38] sm:$0xff] %v473
  // Predicated region
  $region14: #{upsampler_forward.1} parent=0 // pred_check
    _
  $region15: #{upsampler_forward.1} parent=0 // pred_check_branch
    %493 = sbr.rel (0) target = $region17
  $region16: #{upsampler_forward.1} parent=0 // pred_region
    _
  $region17: #{upsampler_forward.1} parent=0 // pred_fallthru
    _
  // Predicated region
  $region18: #{upsampler_forward.1} parent=0 // pred_check
    _
  $region19: #{upsampler_forward.1} parent=0 // pred_check_branch
    %495 = sbr.rel (0) target = $region21
  $region20: #{upsampler_forward.1} parent=0 // pred_region
    _
  $region21: #{upsampler_forward.1} parent=0 // pred_fallthru
    _

</llo_original>
